<compile_context>
chip_gen: v5e
topology: v5e:2x2
jax: 0.10.0
libtpu: 0.0.40
codegen_flags: <defaults>
</compile_context>

<pallas_src>
import math

import jax
import jax.numpy as jnp
from jax.experimental import pallas as pl
from jax.experimental.pallas import tpu as pltpu


def _round_up(a, b):
    return ((a + b - 1) // b) * b


def _sublane_multiple(itemsize):
    # Minimum sublane tile per element width: f32 -> 8, bf16 -> 16, int8/fp8 -> 32.
    return {4: 8, 2: 16, 1: 32}.get(itemsize, 8)


def _target_block_bytes():
    # Per-operand block budget.  3 operands x 2 pipeline buffers must stay
    # under the scoped-VMEM default: 16 MiB (<= v5) -> 2 MiB blocks (12 MiB
    # total); 32 MiB (v6e / v7x) -> 4 MiB blocks (24 MiB total), large enough
    # to sit on the HBM-roofline plateau even at v7x's 3.2 TB/s.
    try:
        kind = jax.devices()[0].device_kind.lower()
    except Exception:
        kind = ""
    if any(v in kind for v in ("v2", "v3", "v4", "v5")):
        return 2 * 1024 * 1024
    return 4 * 1024 * 1024


def _softcmp_kernel(params_ref, x_ref, y_ref, o_ref):
    # params_ref (SMEM, f32): [scale] with scale = 1 / exp(beta).
    scale = params_ref[0]
    x = x_ref[...].astype(jnp.float32)
    y = y_ref[...].astype(jnp.float32)
    o_ref[...] = jax.nn.sigmoid((x - y) * scale).astype(o_ref.dtype)


def _softcmp_scalar_y_kernel(params_ref, x_ref, o_ref):
    # params_ref (SMEM, f32): [scale, y_scalar].
    scale = params_ref[0]
    y = params_ref[1]
    x = x_ref[...].astype(jnp.float32)
    o_ref[...] = jax.nn.sigmoid((x - y) * scale).astype(o_ref.dtype)


def soft_cmp(x, y, beta):
    """Pallas implementation of SoftCmp.forward(x, y, beta)."""
    x = jnp.asarray(x)
    y = jnp.asarray(y)

    out_dtype = jnp.promote_types(x.dtype, y.dtype)
    if not jnp.issubdtype(out_dtype, jnp.floating):
        out_dtype = jnp.float32

    # Runtime scalar in SMEM (works for python floats and traced betas alike);
    # distinct beta values therefore never force a Mosaic recompile.
    scale = jnp.exp(-jnp.asarray(beta, jnp.float32)).reshape(1)

    bshape = jnp.broadcast_shapes(x.shape, y.shape)
    if x.shape != bshape:
        x = jnp.broadcast_to(x, bshape)
    scalar_y = y.size == 1
    if scalar_y:
        params = jnp.concatenate([scale, y.reshape(1).astype(jnp.float32)])
    else:
        params = scale
        if y.shape != bshape:
            # TODO(synk): non-scalar broadcasting still materializes y in HBM.
            y = jnp.broadcast_to(y, bshape)

    n = x.size
    if n == 0:
        return jnp.zeros(bshape, out_dtype)

    itemsizes = [x.dtype.itemsize, jnp.dtype(out_dtype).itemsize]
    if not scalar_y:
        itemsizes.append(y.dtype.itemsize)
    itemsize = max(itemsizes)
    sub = max(_sublane_multiple(s) for s in itemsizes)
    block_bytes = _target_block_bytes()

    if n % 128 == 0:
        # Lane-dense flat view (bitcast reshape, zero HBM copies).  The last
        # grid block may be ragged, so no padding and no divisor hunting.
        lanes = 128
        for cand in (1024, 512, 256):
            if n % cand == 0:
                lanes = cand
                break
        rows = n // lanes
        if rows * lanes * itemsize <= block_bytes:
            row_block = rows  # single block; a full-dim block is always legal
        else:
            row_block = max(sub, (block_bytes // (lanes * itemsize)) // sub * sub)
        xv = x.reshape(rows, lanes)
        yv = None if scalar_y else y.reshape(rows, lanes)
        view_shape = (rows, lanes)
        block_shape = (row_block, lanes)
        index_map = lambda i: (i, 0)
        grid = (pl.cdiv(rows, row_block),)
    else:
        # Total size not a multiple of 128: keep the original layout (no pad,
        # no slice).  Block over the merged leading dims and keep the trailing
        # (sublane, lane) slab whole so the BlockSpec stays legal.
        if x.ndim >= 2:
            r, c = bshape[-2], bshape[-1]
            b = n // (r * c)
        else:
            r, c = 1, n
            b = 1
        # VMEM footprint of one leading index after (sublane, lane) tiling.
        padded_slab_bytes = _round_up(r, sub) * _round_up(c, 128) * itemsize
        if padded_slab_bytes > block_bytes:
            # TODO(synk): rare shape class (huge trailing slab whose total size
            # is not a 128-multiple); plain fused XLA elementwise is already at
            # the HBM roofline here, so skip the Pallas path.
            res = jax.nn.sigmoid(
                (x.astype(jnp.float32) - y.astype(jnp.float32)) * scale[0]
            )
            return res.astype(out_dtype).reshape(bshape)
        b_block = max(1, min(b, block_bytes // padded_slab_bytes))
        xv = x.reshape(b, r, c)
        yv = None if scalar_y else y.reshape(b, r, c)
        view_shape = (b, r, c)
        block_shape = (b_block, r, c)
        index_map = lambda i: (i, 0, 0)
        grid = (pl.cdiv(b, b_block),)

    data_spec = pl.BlockSpec(block_shape, index_map)
    smem_spec = pl.BlockSpec(memory_space=pltpu.MemorySpace.SMEM)

    if scalar_y:
        kernel = _softcmp_scalar_y_kernel
        in_specs = [smem_spec, data_spec]
        operands = (params, xv)
    else:
        kernel = _softcmp_kernel
        in_specs = [smem_spec, data_spec, data_spec]
        operands = (params, xv, yv)

    out = pl.pallas_call(
        kernel,
        out_shape=jax.ShapeDtypeStruct(view_shape, out_dtype),
        grid=grid,
        in_specs=in_specs,
        out_specs=pl.BlockSpec(block_shape, index_map),
        compiler_params=pltpu.CompilerParams(
            # Grid steps are independent -> shard them across TensorCores.
            dimension_semantics=("parallel",),
        ),
    )(*operands)

    # TODO(synk): forward only (matches the nn.Module spec); no custom_vjp.
    return out.reshape(bshape)


if __name__ == "__main__":
    key = jax.random.PRNGKey(0)
    kx, ky = jax.random.split(key)
    beta = 0.5

    # 1) Aligned, same-shape f32 (lane-dense flat path).
    x = jax.random.normal(kx, (2, 4, 16, 16), dtype=jnp.float32)
    y = jax.random.normal(ky, (2, 4, 16, 16), dtype=jnp.float32)
    out = soft_cmp(x, y, beta)
    jax.block_until_ready(out)
    ref = jax.nn.sigmoid((x - y) / math.exp(beta))
    assert out.shape == x.shape and out.dtype == x.dtype
    assert jnp.allclose(out, ref, atol=1e-5, rtol=1e-5)

    # 2) Non-128-multiple size (original-layout path, no pad/slice copies).
    x2 = jax.random.normal(kx, (3, 5, 7), dtype=jnp.float32)
    y2 = jax.random.normal(ky, (3, 5, 7), dtype=jnp.float32)
    out2 = soft_cmp(x2, y2, beta)
    jax.block_until_ready(out2)
    ref2 = jax.nn.sigmoid((x2 - y2) / math.exp(beta))
    assert out2.shape == x2.shape
    assert jnp.allclose(out2, ref2, atol=1e-5, rtol=1e-5)

    # 3) Scalar y (kept in SMEM, never broadcast to a full HBM array).
    out3 = soft_cmp(x, 0.3, beta)
    jax.block_until_ready(out3)
    ref3 = jax.nn.sigmoid((x - 0.3) / math.exp(beta))
    assert jnp.allclose(out3, ref3, atol=1e-5, rtol=1e-5)

    # 4) bf16 inputs (dtype-aware sublane tiling).
    xb = x.reshape(8, 16, 16).astype(jnp.bfloat16)
    yb = y.reshape(8, 16, 16).astype(jnp.bfloat16)
    out4 = soft_cmp(xb, yb, beta)
    jax.block_until_ready(out4)
    ref4 = jax.nn.sigmoid(
        (xb.astype(jnp.float32) - yb.astype(jnp.float32)) / math.exp(beta)
    )
    assert out4.dtype == jnp.bfloat16
    assert jnp.allclose(out4.astype(jnp.float32), ref4, atol=2e-2, rtol=2e-2)

    print("KERNEL_OK")
</pallas_src>

<mosaic_0001>
module attributes {stable_mosaic.version = 11 : i64} {
  func.func @_softcmp_kernel(%arg0: i32, %arg1: memref<1xf32, #tpu.memory_space<smem>>, %arg2: memref<2x1024xf32, #tpu.memory_space<vmem>>, %arg3: memref<2x1024xf32, #tpu.memory_space<vmem>>, %arg4: memref<2x1024xf32, #tpu.memory_space<vmem>>) attributes {dimension_semantics = [#tpu.dimension_semantics<parallel>], iteration_bounds = array<i64: 1>, scalar_prefetch = 0 : i64, scratch_operands = 0 : i64, tpu.core_type = #tpu.core_type<tc>, window_params = [{transform_indices = @transform_0, window_bounds = array<i64: 1>}, {transform_indices = @transform_1, window_bounds = array<i64: 2, 1024>}, {transform_indices = @transform_2, window_bounds = array<i64: 2, 1024>}, {transform_indices = @transform_3, window_bounds = array<i64: 2, 1024>}]} {
    %c0 = arith.constant 0 : index
    %0 = memref.load %arg1[%c0] : memref<1xf32, #tpu.memory_space<smem>>
    %c0_0 = arith.constant 0 : index
    %c0_1 = arith.constant 0 : index
    %1 = vector.load %arg2[%c0_0, %c0_1] : memref<2x1024xf32, #tpu.memory_space<vmem>>, vector<2x1024xf32>
    %c0_2 = arith.constant 0 : index
    %c0_3 = arith.constant 0 : index
    %2 = vector.load %arg3[%c0_2, %c0_3] : memref<2x1024xf32, #tpu.memory_space<vmem>>, vector<2x1024xf32>
    %3 = arith.subf %1, %2 : vector<2x1024xf32>
    %4 = vector.broadcast %0 : f32 to vector<2x1024xf32>
    %5 = arith.mulf %3, %4 : vector<2x1024xf32>
    %6 = arith.negf %5 : vector<2x1024xf32>
    %7 = math.exp %6 : vector<2x1024xf32>
    %cst = arith.constant 1.000000e+00 : f32
    %8 = vector.broadcast %cst : f32 to vector<2x1024xf32>
    %9 = arith.addf %8, %7 : vector<2x1024xf32>
    %10 = arith.divf %8, %9 : vector<2x1024xf32>
    %c0_4 = arith.constant 0 : index
    %c0_5 = arith.constant 0 : index
    %11 = vector.load %arg4[%c0_4, %c0_5] : memref<2x1024xf32, #tpu.memory_space<vmem>>, vector<2x1024xf32>
    tpu.vector_store %arg4[%c0_4, %c0_5], %10 {strides = array<i32>} : memref<2x1024xf32, #tpu.memory_space<vmem>>, vector<2x1024xf32>,
    return
  }
  func.func @transform_0(%arg0: i32) -> i32 {
    %c0_i32 = arith.constant 0 : i32
    %c0_i32_0 = arith.constant 0 : i32
    return %c0_i32 : i32
  }
  func.func @transform_1(%arg0: i32) -> (i32, i32) {
    %c0_i32 = arith.constant 0 : i32
    %c0_i32_0 = arith.constant 0 : i32
    return %arg0, %c0_i32 : i32, i32
  }
  func.func @transform_2(%arg0: i32) -> (i32, i32) {
    %c0_i32 = arith.constant 0 : i32
    %c0_i32_0 = arith.constant 0 : i32
    return %arg0, %c0_i32 : i32, i32
  }
  func.func @transform_3(%arg0: i32) -> (i32, i32) {
    %c0_i32 = arith.constant 0 : i32
    %c0_i32_0 = arith.constant 0 : i32
    return %arg0, %c0_i32 : i32, i32
  }
}

</mosaic_0001>

<llo_original>
// kernel: tpu_custom_call.1
$region0: #{tpu_custom_call.1}
  #allocation0 [shape = 'u32[]', space=smem, size = 0x4, offset = 0x4, fixed_abs, tag = 'smem constant byte address 0x4 - core index']
  #allocation1 [shape = 'u32[72,128]{1,0:T(1,128)}', space=vmem, size = 0x9000, scoped, tag = 'internal scratch']
  #allocation2 [shape = 'f32[1]{0:T(128)S(6)}', space=smem, size = 0x200, scoped, tag = 'scoped memory for tpu_custom_call.1']
  %s0 = inlined_call_operand.<no memory space> [shape: f32[1], index: 0, kind: input, shape index: {}]
  %s1 = inlined_call_operand.hbm [shape: f32[2,1024], index: 1, kind: input, shape index: {}]
  %s2 = inlined_call_operand.hbm [shape: f32[2,1024], index: 2, kind: input, shape index: {}]
  %s3 = inlined_call_operand.hbm [shape: f32[2,1024], index: 3, kind: output, shape index: {}]
  %s4 = sld [smem:[#allocation0]]
  $region30: #{tpu_custom_call.1} parent=0
    _
  %s6 = ssub.s32 1, %s4
  %s7 = scalar_select 0, %s6, %s4
  %8 = sst [smem:[#allocation2]] %s0
  $region1: #{tpu_custom_call.1} parent=0
    #allocation3 [shape = 'u8[8192]{0}', space=vmem, size = 0x2000, scoped, tag = 'input window, operand 1, single buffered']
    #allocation4 [shape = 's32[1]{0}', space=sflag, size = 0x4, scoped, tag = 'scoped memory for tpu_custom_call.1']
    #allocation5 [shape = 's32[1]{0}', space=sflag, size = 0x4, scoped, tag = 'scoped memory for tpu_custom_call.1']
    #allocation6 [shape = 'u8[8192]{0}', space=vmem, size = 0x2000, scoped, tag = 'input window, operand 2, single buffered']
    #allocation7 [shape = 's32[1]{0}', space=sflag, size = 0x4, scoped, tag = 'scoped memory for tpu_custom_call.1']
    #allocation8 [shape = 'u8[8192]{0}', space=vmem, size = 0x2000, scoped, tag = 'output window, operand 0, single buffered']
    %9 = vsyncpa [#allocation4], 0
    %10 = vsyncpa [#allocation7], 0
    %11 = vsyncpa [#allocation5], 0
    // Predicated region
    $region2: #{tpu_custom_call.1} parent=1 // pred_check
      _
    $region3: #{tpu_custom_call.1} parent=1 // pred_check_branch
      %13 = sbr.rel (0) target = $region5
    $region4: #{tpu_custom_call.1} parent=1 // pred_region
      _
    $region5: #{tpu_custom_call.1} parent=1 // pred_fallthru
      _
    // Predicated region
    $region6: #{tpu_custom_call.1} parent=1 // pred_check
      _
    $region7: #{tpu_custom_call.1} parent=1 // pred_check_branch
      %15 = sbr.rel (0) target = $region9
    $region8: #{tpu_custom_call.1} parent=1 // pred_region
      %17 = vsyncadd [#allocation4], 0
      %s19 = sshll.u32 %s1, 4
      %s20 = int_to_ptr.hbm [resolvable:$true] %s19
      %s21 = sshll.u32 [#allocation3], 4
      %s22 = int_to_ptr.vmem [resolvable:$true] %s21
      %24 = dma.hbm_to_vmem [thread:$0]  %s20, 256, %s22, [#allocation4]
    $region9: #{tpu_custom_call.1} parent=1 // pred_fallthru
      _
    // Predicated region
    $region10: #{tpu_custom_call.1} parent=1 // pred_check
      _
    $region11: #{tpu_custom_call.1} parent=1 // pred_check_branch
      %26 = sbr.rel (0) target = $region13
    $region12: #{tpu_custom_call.1} parent=1 // pred_region
      %28 = vsyncadd [#allocation7], 0
      %s30 = sshll.u32 %s2, 4
      %s31 = int_to_ptr.hbm [resolvable:$true] %s30
      %s32 = sshll.u32 [#allocation6], 4
      %s33 = int_to_ptr.vmem [resolvable:$true] %s32
      %35 = dma.hbm_to_vmem [thread:$0]  %s31, 256, %s33, [#allocation7]
    $region13: #{tpu_custom_call.1} parent=1 // pred_fallthru
      _
    // Predicated region
    $region14: #{tpu_custom_call.1} parent=1 // pred_check
      _
    $region15: #{tpu_custom_call.1} parent=1 // pred_check_branch
      %37 = sbr.rel (0) target = $region17
    $region16: #{tpu_custom_call.1} parent=1 // pred_region
      %39 = dma.done [#allocation4], 256
    $region17: #{tpu_custom_call.1} parent=1 // pred_fallthru
      _
    // Predicated region
    $region18: #{tpu_custom_call.1} parent=1 // pred_check
      _
    $region19: #{tpu_custom_call.1} parent=1 // pred_check_branch
      %41 = sbr.rel (0) target = $region21
    $region20: #{tpu_custom_call.1} parent=1 // pred_region
      %43 = dma.done [#allocation7], 256
    $region21: #{tpu_custom_call.1} parent=1 // pred_fallthru
      _
    %s44 = sld [smem:[#allocation2]]
    %v45 = vld [vmem:[#allocation3] sm:$0xff]
    %v46 = vld [vmem:[#allocation3 + $0x8] sm:$0xff]
    %v47 = vld [vmem:[#allocation6] sm:$0xff]
    %v48 = vld [vmem:[#allocation6 + $0x8] sm:$0xff]
    %v49 = vsub.f32 %v45, %v47
    %v50 = vsub.f32 %v46, %v48
    %v51 = vstv %s44
    %v52 = vmul.f32 %v49, %v51
    %v53 = vmul.f32 %v50, %v51
    %v54 = vxor.u32 %v52, 2147483648
    %v55 = vxor.u32 %v53, 2147483648
    %v56 = vmul.f32 %v54, 1.442695
    %v57 = vpow.pop %v56
    %v58 = vmul.f32 %v55, 1.442695
    %v59 = vpow.pop %v58
    %v60 = vadd.f32 %v57, 1.0
    %v61 = vadd.f32 %v59, 1.0
    %v62 = vrcp.pop %v60
    %v63 = vmul.f32 %v60, %v62
    %v64 = vsub.f32 1.0, %v63
    %v65 = vmul.f32 %v62, %v64
    %v66 = vadd.f32 %v62, %v65
    %vm67 = vweird.f32 %v60
    %vm68 = vweird.f32 %v62
    %vm69 = vmor %vm67, %vm68
    %v70 = vsel %vm69, %v62, %v66
    %v71 = vand.u32 2147483647, %v60
    %vm72 = vcmp.eq.f32.partialorder %v71, 8.507059e+37
    %v73 = vand.u32 %v60, 2147483648
    %v74 = vor.u32 1.1754944e-38, %v73
    %v75 = vsel %vm72, %v74, %v70
    %v76 = vmul.f32 1.0, %v75
    %v77 = vrcp.pop %v61
    %v78 = vmul.f32 %v61, %v77
    %v79 = vsub.f32 1.0, %v78
    %v80 = vmul.f32 %v77, %v79
    %v81 = vadd.f32 %v77, %v80
    %vm82 = vweird.f32 %v61
    %vm83 = vweird.f32 %v77
    %vm84 = vmor %vm82, %vm83
    %v85 = vsel %vm84, %v77, %v81
    %v86 = vand.u32 2147483647, %v61
    %vm87 = vcmp.eq.f32.partialorder %v86, 8.507059e+37
    %v88 = vand.u32 %v61, 2147483648
    %v89 = vor.u32 1.1754944e-38, %v88
    %v90 = vsel %vm87, %v89, %v85
    %v91 = vmul.f32 1.0, %v90
    %92 = vst [vmem:[#allocation8] sm:$0xff] %v76
    %93 = vst [vmem:[#allocation8 + $0x8] sm:$0xff] %v91
    // Predicated region
    $region22: #{tpu_custom_call.1} parent=1 // pred_check
      _
    $region23: #{tpu_custom_call.1} parent=1 // pred_check_branch
      %95 = sbr.rel (0) target = $region25
    $region24: #{tpu_custom_call.1} parent=1 // pred_region
      %97 = vsyncadd [#allocation5], 0
      %s99 = sshll.u32 [#allocation8], 4
      %s100 = int_to_ptr.vmem [resolvable:$true] %s99
      %s101 = sshll.u32 %s3, 4
      %s102 = int_to_ptr.hbm [resolvable:$true] %s101
      %104 = dma.vmem_to_hbm [thread:$0]  %s100, 256, %s102, [#allocation5]
    $region25: #{tpu_custom_call.1} parent=1 // pred_fallthru
      _
    // Predicated region
    $region26: #{tpu_custom_call.1} parent=1 // pred_check
      _
    $region27: #{tpu_custom_call.1} parent=1 // pred_check_branch
      %106 = sbr.rel (0) target = $region29
    $region28: #{tpu_custom_call.1} parent=1 // pred_region
      %108 = dma.done [#allocation5], 256
    $region29: #{tpu_custom_call.1} parent=1 // pred_fallthru
      _
    %109 = vsyncpa [#allocation4], 1
    %110 = vsyncpa [#allocation7], 1
    %111 = vsyncpa [#allocation5], 1

</llo_original>
